<compile_context>
chip_gen: v7x
topology: tpu7x:2x2x1
jax: 0.10.0
libtpu: 0.0.40
codegen_flags: <defaults>
</compile_context>

<pallas_src>
import math

import jax
import jax.numpy as jnp
from jax.experimental import pallas as pl
from jax.experimental.pallas import tpu as pltpu


def _channel_att_kernel(x_ref, w_ref, b_ref, o_ref):
    """sigmoid(x_flat @ W_total + b) -- one lane-dense MXU matmul, one (B, 128) store."""
    x = x_ref[...].astype(jnp.float32)                       # (B, K) upcast after load
    z = jnp.dot(x, w_ref[...], preferred_element_type=jnp.float32)   # (B, 128)
    o_ref[...] = jax.nn.sigmoid(z + b_ref[...])


@jax.jit
def channel_att_bridge(ts, conv_w, lin_ws, lin_bs):
    """ts: 5 NCHW arrays; conv_w: (3,) Conv1d(1,1,3) kernel; lin_ws[i]: (c_i, Csum); lin_bs[i]: (c_i,)."""
    B = ts[0].shape[0]
    c_list = [t.shape[1] for t in ts]
    hw_list = [t.shape[2] * t.shape[3] for t in ts]
    L = sum(c_list)                      # Csum (= 64 for the default config)
    N_PAD = 128                          # lane-dense output width

    # Banded matrix of the k=3 / pad=1 Conv1d (cross-correlation) so that
    # att_conv = att @ cm, i.e. att_conv[:, j] = w0*att[:, j-1] + w1*att[:, j] + w2*att[:, j+1].
    idx = jnp.arange(L)
    cm = (conv_w[0] * (idx[:, None] == idx[None, :] - 1)
          + conv_w[1] * (idx[:, None] == idx[None, :])
          + conv_w[2] * (idx[:, None] == idx[None, :] + 1)).astype(jnp.float32)

    # Fold conv + the 5 Linear heads into one (L, L) weight and one bias.
    w_all = jnp.concatenate([w.T.astype(jnp.float32) for w in lin_ws], axis=1)      # (L, L)
    w_heads = jnp.dot(cm, w_all, preferred_element_type=jnp.float32,
                      precision=jax.lax.Precision.HIGHEST)                          # (L, L)
    b_all = jnp.concatenate([b.astype(jnp.float32) for b in lin_bs])                # (L,)

    # Fold the global average pool into the weight: for tensor i every pixel of
    # channel j contributes w_heads[off_i + j, :] / (Hi*Wi), so W_total is the
    # row-repeated, 1/hw-scaled stack of w_heads blocks (== P_avg @ w_heads).
    w_blocks, off_c = [], 0
    for c, hw in zip(c_list, hw_list):
        w_i = w_heads[off_c:off_c + c, :] * jnp.float32(1.0 / hw)   # (c, L)
        w_blocks.append(jnp.repeat(w_i, hw, axis=0))                # (c*hw, L)
        off_c += c
    w_total = jnp.concatenate(w_blocks, axis=0)                      # (K, L), K = sum c*hw
    # Zero-pad the N dimension to 128 for unmasked, full-lane output stores.
    w_total = jnp.pad(w_total, ((0, 0), (0, N_PAD - L)))             # (K, 128)
    b_pad = jnp.pad(b_all, (0, N_PAD - L)).reshape(1, N_PAD)         # (1, 128)

    # One lane-dense input slab (B, K) in the tensors' native dtype (no upcast here).
    x_flat = jnp.concatenate(
        [t.reshape(B, c * hw) for t, c, hw in zip(ts, c_list, hw_list)], axis=1)

    vmem = pl.BlockSpec(memory_space=pltpu.MemorySpace.VMEM)
    att = pl.pallas_call(
        _channel_att_kernel,
        out_shape=jax.ShapeDtypeStruct((B, N_PAD), jnp.float32),
        in_specs=[vmem, vmem, vmem],
        out_specs=vmem,
    )(x_flat, w_total, b_pad)

    att = att[:, :L]                                                 # drop lane padding

    # Split into per-tensor attentions. PyTorch's expand_as is a broadcast view,
    # so return broadcast-ready (B, c_i, 1, 1) maps instead of materializing NCHW copies.
    outs, off = [], 0
    for c in c_list:
        outs.append(att[:, off:off + c].reshape(B, c, 1, 1))
        off += c
    return tuple(outs)


def reference(ts, conv_w, lin_ws, lin_bs):
    """Op-by-op JAX reference of the PyTorch module (full expand_as shapes)."""
    pooled = [t.astype(jnp.float32).mean(axis=(2, 3)) for t in ts]
    att = jnp.concatenate(pooled, axis=1)
    padded = jnp.pad(att, ((0, 0), (1, 1)))
    conv = (conv_w[0] * padded[:, :-2]
            + conv_w[1] * padded[:, 1:-1]
            + conv_w[2] * padded[:, 2:])
    outs = [jax.nn.sigmoid(conv @ w.T + b) for w, b in zip(lin_ws, lin_bs)]
    return tuple(jnp.broadcast_to(o[:, :, None, None], t.shape) for o, t in zip(outs, ts))


if __name__ == "__main__":
    # Module config: c_list = [4, 8, 12, 16, 24, 32]; the bridge uses the first 5.
    c_used = [4, 8, 12, 16, 24]
    spatial = [(16, 16), (8, 8), (8, 8), (4, 4), (4, 4)]
    B = 2
    L = sum(c_used)  # c_list_sum = sum(c_list) - c_list[-1] = 64

    key = jax.random.PRNGKey(0)
    keys = jax.random.split(key, 16)

    # Deterministic synthetic inputs.
    ts = tuple(
        jax.random.normal(keys[i], (B, c, h, w), dtype=jnp.float32)
        for i, (c, (h, w)) in enumerate(zip(c_used, spatial))
    )

    # Deterministic synthetic parameters (shapes per nn.Conv1d / nn.Linear).
    conv_w = jax.random.normal(keys[5], (3,), dtype=jnp.float32) * 0.5       # Conv1d(1,1,3) weight
    lin_ws = [
        jax.random.normal(keys[6 + i], (c, L), dtype=jnp.float32) / math.sqrt(L)
        for i, c in enumerate(c_used)
    ]
    lin_bs = [
        jax.random.normal(keys[11 + i], (c,), dtype=jnp.float32) * 0.1
        for i, c in enumerate(c_used)
    ]

    outs = channel_att_bridge(ts, conv_w, lin_ws, lin_bs)
    outs = jax.block_until_ready(outs)

    refs = reference(ts, conv_w, lin_ws, lin_bs)
    for o, r, t in zip(outs, refs, ts):
        assert o.shape == (t.shape[0], t.shape[1], 1, 1) and o.dtype == jnp.float32
        full = jnp.broadcast_to(o, t.shape)  # equivalent of PyTorch expand_as (a view)
        # Tolerance slightly above the previous 2e-5: folding the average pool into
        # the fused weight reassociates the f32 reduction order (K=2944 terms).
        assert jnp.allclose(full, r, atol=3e-5, rtol=3e-5), "mismatch vs reference"

    print("KERNEL_OK")
</pallas_src>

<mosaic_0001>
module attributes {stable_mosaic.version = 11 : i64} {
  func.func @_channel_att_kernel(%arg0: memref<2x2944xf32, #tpu.memory_space<vmem>>, %arg1: memref<2944x128xf32, #tpu.memory_space<vmem>>, %arg2: memref<1x128xf32, #tpu.memory_space<vmem>>, %arg3: memref<2x128xf32, #tpu.memory_space<vmem>>) attributes {dimension_semantics = [], scalar_prefetch = 0 : i64, scratch_operands = 0 : i64, tpu.core_type = #tpu.core_type<tc>} {
    %c0 = arith.constant 0 : index
    %c0_0 = arith.constant 0 : index
    %0 = vector.load %arg0[%c0, %c0_0] : memref<2x2944xf32, #tpu.memory_space<vmem>>, vector<2x2944xf32>
    %c0_1 = arith.constant 0 : index
    %c0_2 = arith.constant 0 : index
    %1 = vector.load %arg1[%c0_1, %c0_2] : memref<2944x128xf32, #tpu.memory_space<vmem>>, vector<2944x128xf32>
    %cst = arith.constant dense<0.000000e+00> : vector<2x128xf32>
    %2 = tpu.matmul %0, %1, %cst {dimension_numbers = #tpu.dot_dimension_numbers<[1], [0], [0], [1], [0, 0, 1, 1], [], []>} : vector<2x2944xf32>, vector<2944x128xf32>, vector<2x128xf32> -> vector<2x128xf32>
    %c0_3 = arith.constant 0 : index
    %c0_4 = arith.constant 0 : index
    %3 = vector.load %arg2[%c0_3, %c0_4] : memref<1x128xf32, #tpu.memory_space<vmem>>, vector<1x128xf32>
    %4 = vector.broadcast %3 : vector<1x128xf32> to vector<2x128xf32>
    %5 = arith.addf %2, %4 : vector<2x128xf32>
    %6 = arith.negf %5 : vector<2x128xf32>
    %7 = math.exp %6 : vector<2x128xf32>
    %cst_5 = arith.constant 1.000000e+00 : f32
    %8 = vector.broadcast %cst_5 : f32 to vector<2x128xf32>
    %9 = arith.addf %8, %7 : vector<2x128xf32>
    %10 = arith.divf %8, %9 : vector<2x128xf32>
    %c0_6 = arith.constant 0 : index
    %c0_7 = arith.constant 0 : index
    %11 = vector.load %arg3[%c0_6, %c0_7] : memref<2x128xf32, #tpu.memory_space<vmem>>, vector<2x128xf32>
    tpu.vector_store %arg3[%c0_6, %c0_7], %10 {strides = array<i32>} : memref<2x128xf32, #tpu.memory_space<vmem>>, vector<2x128xf32>,
    return
  }
}

</mosaic_0001>

<llo_original>
// kernel: channel_att_bridge.1
$region0: #{channel_att_bridge.1}
  #allocation0 [shape = 'u32[]', space=smem, size = 0x4, offset = 0x4, fixed_abs, tag = 'smem constant byte address 0x4 - core index']
  #allocation1 [shape = 'u32[144,128]{1,0:T(1,128)}', space=vmem, size = 0x12000, scoped, tag = 'internal scratch']
  %s0 = inlined_call_operand.vmem [shape: f32[2,2944], index: 0, kind: input, shape index: {}]
  %s1 = inlined_call_operand.vmem [shape: f32[2944,128], index: 1, kind: input, shape index: {}]
  %s2 = inlined_call_operand.vmem [shape: f32[1,128], index: 2, kind: input, shape index: {}]
  %s3 = inlined_call_operand.vmem [shape: f32[2,128], index: 3, kind: output, shape index: {}]
  %s4 = sld [smem:[#allocation0]]
  $region22: #{channel_att_bridge.1} parent=0
    _
  %s6 = ssub.s32 1, %s4
  %s7 = scalar_select 0, %s6, %s4
  // Predicated region
  $region2: #{channel_att_bridge.1} parent=0 // pred_check
    _
  $region3: #{channel_att_bridge.1} parent=0 // pred_check_branch
    %9 = sbr.rel (0) target = $region5
  $region4: #{channel_att_bridge.1} parent=0 // pred_region
    _
  $region5: #{channel_att_bridge.1} parent=0 // pred_fallthru
    _
  // Predicated region
  $region6: #{channel_att_bridge.1} parent=0 // pred_check
    _
  $region7: #{channel_att_bridge.1} parent=0 // pred_check_branch
    %11 = sbr.rel (0) target = $region9
  $region8: #{channel_att_bridge.1} parent=0 // pred_region
    _
  $region9: #{channel_att_bridge.1} parent=0 // pred_fallthru
    _
  // Predicated region
  $region10: #{channel_att_bridge.1} parent=0 // pred_check
    _
  $region11: #{channel_att_bridge.1} parent=0 // pred_check_branch
    %13 = sbr.rel (0) target = $region13
  $region12: #{channel_att_bridge.1} parent=0 // pred_region
    _
  $region13: #{channel_att_bridge.1} parent=0 // pred_fallthru
    _
  %v14 = vld [vmem:[%s0] sm:$0xff]
  %v15 = vld [vmem:[%s0 + $0x8] sm:$0xff]
  %v16 = vld [vmem:[%s0 + $0x10] sm:$0xff]
  %v17 = vld [vmem:[%s0 + $0x18] sm:$0xff]
  %v18 = vld [vmem:[%s0 + $0x20] sm:$0xff]
  %v19 = vld [vmem:[%s0 + $0x28] sm:$0x3f]
  %v20 = vld [vmem:[%s1] sm:$0xff]
  %v21 = vld [vmem:[%s1 + $0x8] sm:$0xff]
  %v22 = vld [vmem:[%s1 + $0x10] sm:$0xff]
  %v23 = vld [vmem:[%s1 + $0x18] sm:$0xff]
  %v24 = vld [vmem:[%s1 + $0x20] sm:$0xff]
  %v25 = vld [vmem:[%s1 + $0x28] sm:$0xff]
  %v26 = vld [vmem:[%s1 + $0x30] sm:$0xff]
  %v27 = vld [vmem:[%s1 + $0x38] sm:$0xff]
  %v28 = vld [vmem:[%s1 + $0x40] sm:$0xff]
  %v29 = vld [vmem:[%s1 + $0x48] sm:$0xff]
  %v30 = vld [vmem:[%s1 + $0x50] sm:$0xff]
  %v31 = vld [vmem:[%s1 + $0x58] sm:$0xff]
  %v32 = vld [vmem:[%s1 + $0x60] sm:$0xff]
  %v33 = vld [vmem:[%s1 + $0x68] sm:$0xff]
  %v34 = vld [vmem:[%s1 + $0x70] sm:$0xff]
  %v35 = vld [vmem:[%s1 + $0x78] sm:$0xff]
  %v36 = vld [vmem:[%s1 + $0x80] sm:$0xff]
  %v37 = vld [vmem:[%s1 + $0x88] sm:$0xff]
  %v38 = vld [vmem:[%s1 + $0x90] sm:$0xff]
  %v39 = vld [vmem:[%s1 + $0x98] sm:$0xff]
  %v40 = vld [vmem:[%s1 + $0xa0] sm:$0xff]
  %v41 = vld [vmem:[%s1 + $0xa8] sm:$0xff]
  %v42 = vld [vmem:[%s1 + $0xb0] sm:$0xff]
  %v43 = vld [vmem:[%s1 + $0xb8] sm:$0xff]
  %v44 = vld [vmem:[%s1 + $0xc0] sm:$0xff]
  %v45 = vld [vmem:[%s1 + $0xc8] sm:$0xff]
  %v46 = vld [vmem:[%s1 + $0xd0] sm:$0xff]
  %v47 = vld [vmem:[%s1 + $0xd8] sm:$0xff]
  %v48 = vld [vmem:[%s1 + $0xe0] sm:$0xff]
  %v49 = vld [vmem:[%s1 + $0xe8] sm:$0xff]
  %v50 = vld [vmem:[%s1 + $0xf0] sm:$0xff]
  %v51 = vld [vmem:[%s1 + $0xf8] sm:$0xff]
  %v52 = vld [vmem:[%s1 + $0x100] sm:$0xff]
  %v53 = vld [vmem:[%s1 + $0x108] sm:$0xff]
  %v54 = vld [vmem:[%s1 + $0x110] sm:$0xff]
  %v55 = vld [vmem:[%s1 + $0x118] sm:$0xff]
  %v56 = vld [vmem:[%s1 + $0x120] sm:$0xff]
  %v57 = vld [vmem:[%s1 + $0x128] sm:$0xff]
  %v58 = vld [vmem:[%s1 + $0x130] sm:$0xff]
  %v59 = vld [vmem:[%s1 + $0x138] sm:$0xff]
  %v60 = vld [vmem:[%s1 + $0x140] sm:$0xff]
  %v61 = vld [vmem:[%s1 + $0x148] sm:$0xff]
  %v62 = vld [vmem:[%s1 + $0x150] sm:$0xff]
  %v63 = vld [vmem:[%s1 + $0x158] sm:$0xff]
  %v64 = vld [vmem:[%s1 + $0x160] sm:$0xff]
  %v65 = vld [vmem:[%s1 + $0x168] sm:$0xff]
  %v66 = vld [vmem:[%s1 + $0x170] sm:$0xff]
  %v67 = vld [vmem:[%s1 + $0x178] sm:$0xff]
  %v68 = vld [vmem:[%s1 + $0x180] sm:$0xff]
  %v69 = vld [vmem:[%s1 + $0x188] sm:$0xff]
  %v70 = vld [vmem:[%s1 + $0x190] sm:$0xff]
  %v71 = vld [vmem:[%s1 + $0x198] sm:$0xff]
  %v72 = vld [vmem:[%s1 + $0x1a0] sm:$0xff]
  %v73 = vld [vmem:[%s1 + $0x1a8] sm:$0xff]
  %v74 = vld [vmem:[%s1 + $0x1b0] sm:$0xff]
  %v75 = vld [vmem:[%s1 + $0x1b8] sm:$0xff]
  %v76 = vld [vmem:[%s1 + $0x1c0] sm:$0xff]
  %v77 = vld [vmem:[%s1 + $0x1c8] sm:$0xff]
  %v78 = vld [vmem:[%s1 + $0x1d0] sm:$0xff]
  %v79 = vld [vmem:[%s1 + $0x1d8] sm:$0xff]
  %v80 = vld [vmem:[%s1 + $0x1e0] sm:$0xff]
  %v81 = vld [vmem:[%s1 + $0x1e8] sm:$0xff]
  %v82 = vld [vmem:[%s1 + $0x1f0] sm:$0xff]
  %v83 = vld [vmem:[%s1 + $0x1f8] sm:$0xff]
  %v84 = vld [vmem:[%s1 + $0x200] sm:$0xff]
  %v85 = vld [vmem:[%s1 + $0x208] sm:$0xff]
  %v86 = vld [vmem:[%s1 + $0x210] sm:$0xff]
  %v87 = vld [vmem:[%s1 + $0x218] sm:$0xff]
  %v88 = vld [vmem:[%s1 + $0x220] sm:$0xff]
  %v89 = vld [vmem:[%s1 + $0x228] sm:$0xff]
  %v90 = vld [vmem:[%s1 + $0x230] sm:$0xff]
  %v91 = vld [vmem:[%s1 + $0x238] sm:$0xff]
  %v92 = vld [vmem:[%s1 + $0x240] sm:$0xff]
  %v93 = vld [vmem:[%s1 + $0x248] sm:$0xff]
  %v94 = vld [vmem:[%s1 + $0x250] sm:$0xff]
  %v95 = vld [vmem:[%s1 + $0x258] sm:$0xff]
  %v96 = vld [vmem:[%s1 + $0x260] sm:$0xff]
  %v97 = vld [vmem:[%s1 + $0x268] sm:$0xff]
  %v98 = vld [vmem:[%s1 + $0x270] sm:$0xff]
  %v99 = vld [vmem:[%s1 + $0x278] sm:$0xff]
  %v100 = vld [vmem:[%s1 + $0x280] sm:$0xff]
  %v101 = vld [vmem:[%s1 + $0x288] sm:$0xff]
  %v102 = vld [vmem:[%s1 + $0x290] sm:$0xff]
  %v103 = vld [vmem:[%s1 + $0x298] sm:$0xff]
  %v104 = vld [vmem:[%s1 + $0x2a0] sm:$0xff]
  %v105 = vld [vmem:[%s1 + $0x2a8] sm:$0xff]
  %v106 = vld [vmem:[%s1 + $0x2b0] sm:$0xff]
  %v107 = vld [vmem:[%s1 + $0x2b8] sm:$0xff]
  %v108 = vld [vmem:[%s1 + $0x2c0] sm:$0xff]
  %v109 = vld [vmem:[%s1 + $0x2c8] sm:$0xff]
  %v110 = vld [vmem:[%s1 + $0x2d0] sm:$0xff]
  %v111 = vld [vmem:[%s1 + $0x2d8] sm:$0xff]
  %v112 = vld [vmem:[%s1 + $0x2e0] sm:$0xff]
  %v113 = vld [vmem:[%s1 + $0x2e8] sm:$0xff]
  %v114 = vld [vmem:[%s1 + $0x2f0] sm:$0xff]
  %v115 = vld [vmem:[%s1 + $0x2f8] sm:$0xff]
  %v116 = vld [vmem:[%s1 + $0x300] sm:$0xff]
  %v117 = vld [vmem:[%s1 + $0x308] sm:$0xff]
  %v118 = vld [vmem:[%s1 + $0x310] sm:$0xff]
  %v119 = vld [vmem:[%s1 + $0x318] sm:$0xff]
  %v120 = vld [vmem:[%s1 + $0x320] sm:$0xff]
  %v121 = vld [vmem:[%s1 + $0x328] sm:$0xff]
  %v122 = vld [vmem:[%s1 + $0x330] sm:$0xff]
  %v123 = vld [vmem:[%s1 + $0x338] sm:$0xff]
  %v124 = vld [vmem:[%s1 + $0x340] sm:$0xff]
  %v125 = vld [vmem:[%s1 + $0x348] sm:$0xff]
  %v126 = vld [vmem:[%s1 + $0x350] sm:$0xff]
  %v127 = vld [vmem:[%s1 + $0x358] sm:$0xff]
  %v128 = vld [vmem:[%s1 + $0x360] sm:$0xff]
  %v129 = vld [vmem:[%s1 + $0x368] sm:$0xff]
  %v130 = vld [vmem:[%s1 + $0x370] sm:$0xff]
  %v131 = vld [vmem:[%s1 + $0x378] sm:$0xff]
  %v132 = vld [vmem:[%s1 + $0x380] sm:$0xff]
  %v133 = vld [vmem:[%s1 + $0x388] sm:$0xff]
  %v134 = vld [vmem:[%s1 + $0x390] sm:$0xff]
  %v135 = vld [vmem:[%s1 + $0x398] sm:$0xff]
  %v136 = vld [vmem:[%s1 + $0x3a0] sm:$0xff]
  %v137 = vld [vmem:[%s1 + $0x3a8] sm:$0xff]
  %v138 = vld [vmem:[%s1 + $0x3b0] sm:$0xff]
  %v139 = vld [vmem:[%s1 + $0x3b8] sm:$0xff]
  %v140 = vld [vmem:[%s1 + $0x3c0] sm:$0xff]
  %v141 = vld [vmem:[%s1 + $0x3c8] sm:$0xff]
  %v142 = vld [vmem:[%s1 + $0x3d0] sm:$0xff]
  %v143 = vld [vmem:[%s1 + $0x3d8] sm:$0xff]
  %v144 = vld [vmem:[%s1 + $0x3e0] sm:$0xff]
  %v145 = vld [vmem:[%s1 + $0x3e8] sm:$0xff]
  %v146 = vld [vmem:[%s1 + $0x3f0] sm:$0xff]
  %v147 = vld [vmem:[%s1 + $0x3f8] sm:$0xff]
  %v148 = vld [vmem:[%s1 + $0x400] sm:$0xff]
  %v149 = vld [vmem:[%s1 + $0x408] sm:$0xff]
  %v150 = vld [vmem:[%s1 + $0x410] sm:$0xff]
  %v151 = vld [vmem:[%s1 + $0x418] sm:$0xff]
  %v152 = vld [vmem:[%s1 + $0x420] sm:$0xff]
  %v153 = vld [vmem:[%s1 + $0x428] sm:$0xff]
  %v154 = vld [vmem:[%s1 + $0x430] sm:$0xff]
  %v155 = vld [vmem:[%s1 + $0x438] sm:$0xff]
  %v156 = vld [vmem:[%s1 + $0x440] sm:$0xff]
  %v157 = vld [vmem:[%s1 + $0x448] sm:$0xff]
  %v158 = vld [vmem:[%s1 + $0x450] sm:$0xff]
  %v159 = vld [vmem:[%s1 + $0x458] sm:$0xff]
  %v160 = vld [vmem:[%s1 + $0x460] sm:$0xff]
  %v161 = vld [vmem:[%s1 + $0x468] sm:$0xff]
  %v162 = vld [vmem:[%s1 + $0x470] sm:$0xff]
  %v163 = vld [vmem:[%s1 + $0x478] sm:$0xff]
  %v164 = vld [vmem:[%s1 + $0x480] sm:$0xff]
  %v165 = vld [vmem:[%s1 + $0x488] sm:$0xff]
  %v166 = vld [vmem:[%s1 + $0x490] sm:$0xff]
  %v167 = vld [vmem:[%s1 + $0x498] sm:$0xff]
  %v168 = vld [vmem:[%s1 + $0x4a0] sm:$0xff]
  %v169 = vld [vmem:[%s1 + $0x4a8] sm:$0xff]
  %v170 = vld [vmem:[%s1 + $0x4b0] sm:$0xff]
  %v171 = vld [vmem:[%s1 + $0x4b8] sm:$0xff]
  %v172 = vld [vmem:[%s1 + $0x4c0] sm:$0xff]
  %v173 = vld [vmem:[%s1 + $0x4c8] sm:$0xff]
  %v174 = vld [vmem:[%s1 + $0x4d0] sm:$0xff]
  %v175 = vld [vmem:[%s1 + $0x4d8] sm:$0xff]
  %v176 = vld [vmem:[%s1 + $0x4e0] sm:$0xff]
  %v177 = vld [vmem:[%s1 + $0x4e8] sm:$0xff]
  %v178 = vld [vmem:[%s1 + $0x4f0] sm:$0xff]
  %v179 = vld [vmem:[%s1 + $0x4f8] sm:$0xff]
  %v180 = vld [vmem:[%s1 + $0x500] sm:$0xff]
  %v181 = vld [vmem:[%s1 + $0x508] sm:$0xff]
  %v182 = vld [vmem:[%s1 + $0x510] sm:$0xff]
  %v183 = vld [vmem:[%s1 + $0x518] sm:$0xff]
  %v184 = vld [vmem:[%s1 + $0x520] sm:$0xff]
  %v185 = vld [vmem:[%s1 + $0x528] sm:$0xff]
  %v186 = vld [vmem:[%s1 + $0x530] sm:$0xff]
  %v187 = vld [vmem:[%s1 + $0x538] sm:$0xff]
  %v188 = vld [vmem:[%s1 + $0x540] sm:$0xff]
  %v189 = vld [vmem:[%s1 + $0x548] sm:$0xff]
  %v190 = vld [vmem:[%s1 + $0x550] sm:$0xff]
  %v191 = vld [vmem:[%s1 + $0x558] sm:$0xff]
  %v192 = vld [vmem:[%s1 + $0x560] sm:$0xff]
  %v193 = vld [vmem:[%s1 + $0x568] sm:$0xff]
  %v194 = vld [vmem:[%s1 + $0x570] sm:$0xff]
  %v195 = vld [vmem:[%s1 + $0x578] sm:$0xff]
  %v196 = vld [vmem:[%s1 + $0x580] sm:$0xff]
  %v197 = vld [vmem:[%s1 + $0x588] sm:$0xff]
  %v198 = vld [vmem:[%s1 + $0x590] sm:$0xff]
  %v199 = vld [vmem:[%s1 + $0x598] sm:$0xff]
  %v200 = vld [vmem:[%s1 + $0x5a0] sm:$0xff]
  %v201 = vld [vmem:[%s1 + $0x5a8] sm:$0xff]
  %v202 = vld [vmem:[%s1 + $0x5b0] sm:$0xff]
  %v203 = vld [vmem:[%s1 + $0x5b8] sm:$0xff]
  %v204 = vld [vmem:[%s1 + $0x5c0] sm:$0xff]
  %v205 = vld [vmem:[%s1 + $0x5c8] sm:$0xff]
  %v206 = vld [vmem:[%s1 + $0x5d0] sm:$0xff]
  %v207 = vld [vmem:[%s1 + $0x5d8] sm:$0xff]
  %v208 = vld [vmem:[%s1 + $0x5e0] sm:$0xff]
  %v209 = vld [vmem:[%s1 + $0x5e8] sm:$0xff]
  %v210 = vld [vmem:[%s1 + $0x5f0] sm:$0xff]
  %v211 = vld [vmem:[%s1 + $0x5f8] sm:$0xff]
  %v212 = vld [vmem:[%s1 + $0x600] sm:$0xff]
  %v213 = vld [vmem:[%s1 + $0x608] sm:$0xff]
  %v214 = vld [vmem:[%s1 + $0x610] sm:$0xff]
  %v215 = vld [vmem:[%s1 + $0x618] sm:$0xff]
  %v216 = vld [vmem:[%s1 + $0x620] sm:$0xff]
  %v217 = vld [vmem:[%s1 + $0x628] sm:$0xff]
  %v218 = vld [vmem:[%s1 + $0x630] sm:$0xff]
  %v219 = vld [vmem:[%s1 + $0x638] sm:$0xff]
  %v220 = vld [vmem:[%s1 + $0x640] sm:$0xff]
  %v221 = vld [vmem:[%s1 + $0x648] sm:$0xff]
  %v222 = vld [vmem:[%s1 + $0x650] sm:$0xff]
  %v223 = vld [vmem:[%s1 + $0x658] sm:$0xff]
  %v224 = vld [vmem:[%s1 + $0x660] sm:$0xff]
  %v225 = vld [vmem:[%s1 + $0x668] sm:$0xff]
  %v226 = vld [vmem:[%s1 + $0x670] sm:$0xff]
  %v227 = vld [vmem:[%s1 + $0x678] sm:$0xff]
  %v228 = vld [vmem:[%s1 + $0x680] sm:$0xff]
  %v229 = vld [vmem:[%s1 + $0x688] sm:$0xff]
  %v230 = vld [vmem:[%s1 + $0x690] sm:$0xff]
  %v231 = vld [vmem:[%s1 + $0x698] sm:$0xff]
  %v232 = vld [vmem:[%s1 + $0x6a0] sm:$0xff]
  %v233 = vld [vmem:[%s1 + $0x6a8] sm:$0xff]
  %v234 = vld [vmem:[%s1 + $0x6b0] sm:$0xff]
  %v235 = vld [vmem:[%s1 + $0x6b8] sm:$0xff]
  %v236 = vld [vmem:[%s1 + $0x6c0] sm:$0xff]
  %v237 = vld [vmem:[%s1 + $0x6c8] sm:$0xff]
  %v238 = vld [vmem:[%s1 + $0x6d0] sm:$0xff]
  %v239 = vld [vmem:[%s1 + $0x6d8] sm:$0xff]
  %v240 = vld [vmem:[%s1 + $0x6e0] sm:$0xff]
  %v241 = vld [vmem:[%s1 + $0x6e8] sm:$0xff]
  %v242 = vld [vmem:[%s1 + $0x6f0] sm:$0xff]
  %v243 = vld [vmem:[%s1 + $0x6f8] sm:$0xff]
  %v244 = vld [vmem:[%s1 + $0x700] sm:$0xff]
  %v245 = vld [vmem:[%s1 + $0x708] sm:$0xff]
  %v246 = vld [vmem:[%s1 + $0x710] sm:$0xff]
  %v247 = vld [vmem:[%s1 + $0x718] sm:$0xff]
  %v248 = vld [vmem:[%s1 + $0x720] sm:$0xff]
  %v249 = vld [vmem:[%s1 + $0x728] sm:$0xff]
  %v250 = vld [vmem:[%s1 + $0x730] sm:$0xff]
  %v251 = vld [vmem:[%s1 + $0x738] sm:$0xff]
  %v252 = vld [vmem:[%s1 + $0x740] sm:$0xff]
  %v253 = vld [vmem:[%s1 + $0x748] sm:$0xff]
  %v254 = vld [vmem:[%s1 + $0x750] sm:$0xff]
  %v255 = vld [vmem:[%s1 + $0x758] sm:$0xff]
  %v256 = vld [vmem:[%s1 + $0x760] sm:$0xff]
  %v257 = vld [vmem:[%s1 + $0x768] sm:$0xff]
  %v258 = vld [vmem:[%s1 + $0x770] sm:$0xff]
  %v259 = vld [vmem:[%s1 + $0x778] sm:$0xff]
  %v260 = vld [vmem:[%s1 + $0x780] sm:$0xff]
  %v261 = vld [vmem:[%s1 + $0x788] sm:$0xff]
  %v262 = vld [vmem:[%s1 + $0x790] sm:$0xff]
  %v263 = vld [vmem:[%s1 + $0x798] sm:$0xff]
  %v264 = vld [vmem:[%s1 + $0x7a0] sm:$0xff]
  %v265 = vld [vmem:[%s1 + $0x7a8] sm:$0xff]
  %v266 = vld [vmem:[%s1 + $0x7b0] sm:$0xff]
  %v267 = vld [vmem:[%s1 + $0x7b8] sm:$0xff]
  %v268 = vld [vmem:[%s1 + $0x7c0] sm:$0xff]
  %v269 = vld [vmem:[%s1 + $0x7c8] sm:$0xff]
  %v270 = vld [vmem:[%s1 + $0x7d0] sm:$0xff]
  %v271 = vld [vmem:[%s1 + $0x7d8] sm:$0xff]
  %v272 = vld [vmem:[%s1 + $0x7e0] sm:$0xff]
  %v273 = vld [vmem:[%s1 + $0x7e8] sm:$0xff]
  %v274 = vld [vmem:[%s1 + $0x7f0] sm:$0xff]
  %v275 = vld [vmem:[%s1 + $0x7f8] sm:$0xff]
  %v276 = vld [vmem:[%s1 + $0x800] sm:$0xff]
  %v277 = vld [vmem:[%s1 + $0x808] sm:$0xff]
  %v278 = vld [vmem:[%s1 + $0x810] sm:$0xff]
  %v279 = vld [vmem:[%s1 + $0x818] sm:$0xff]
  %v280 = vld [vmem:[%s1 + $0x820] sm:$0xff]
  %v281 = vld [vmem:[%s1 + $0x828] sm:$0xff]
  %v282 = vld [vmem:[%s1 + $0x830] sm:$0xff]
  %v283 = vld [vmem:[%s1 + $0x838] sm:$0xff]
  %v284 = vld [vmem:[%s1 + $0x840] sm:$0xff]
  %v285 = vld [vmem:[%s1 + $0x848] sm:$0xff]
  %v286 = vld [vmem:[%s1 + $0x850] sm:$0xff]
  %v287 = vld [vmem:[%s1 + $0x858] sm:$0xff]
  %v288 = vld [vmem:[%s1 + $0x860] sm:$0xff]
  %v289 = vld [vmem:[%s1 + $0x868] sm:$0xff]
  %v290 = vld [vmem:[%s1 + $0x870] sm:$0xff]
  %v291 = vld [vmem:[%s1 + $0x878] sm:$0xff]
  %v292 = vld [vmem:[%s1 + $0x880] sm:$0xff]
  %v293 = vld [vmem:[%s1 + $0x888] sm:$0xff]
  %v294 = vld [vmem:[%s1 + $0x890] sm:$0xff]
  %v295 = vld [vmem:[%s1 + $0x898] sm:$0xff]
  %v296 = vld [vmem:[%s1 + $0x8a0] sm:$0xff]
  %v297 = vld [vmem:[%s1 + $0x8a8] sm:$0xff]
  %v298 = vld [vmem:[%s1 + $0x8b0] sm:$0xff]
  %v299 = vld [vmem:[%s1 + $0x8b8] sm:$0xff]
  %v300 = vld [vmem:[%s1 + $0x8c0] sm:$0xff]
  %v301 = vld [vmem:[%s1 + $0x8c8] sm:$0xff]
  %v302 = vld [vmem:[%s1 + $0x8d0] sm:$0xff]
  %v303 = vld [vmem:[%s1 + $0x8d8] sm:$0xff]
  %v304 = vld [vmem:[%s1 + $0x8e0] sm:$0xff]
  %v305 = vld [vmem:[%s1 + $0x8e8] sm:$0xff]
  %v306 = vld [vmem:[%s1 + $0x8f0] sm:$0xff]
  %v307 = vld [vmem:[%s1 + $0x8f8] sm:$0xff]
  %v308 = vld [vmem:[%s1 + $0x900] sm:$0xff]
  %v309 = vld [vmem:[%s1 + $0x908] sm:$0xff]
  %v310 = vld [vmem:[%s1 + $0x910] sm:$0xff]
  %v311 = vld [vmem:[%s1 + $0x918] sm:$0xff]
  %v312 = vld [vmem:[%s1 + $0x920] sm:$0xff]
  %v313 = vld [vmem:[%s1 + $0x928] sm:$0xff]
  %v314 = vld [vmem:[%s1 + $0x930] sm:$0xff]
  %v315 = vld [vmem:[%s1 + $0x938] sm:$0xff]
  %v316 = vld [vmem:[%s1 + $0x940] sm:$0xff]
  %v317 = vld [vmem:[%s1 + $0x948] sm:$0xff]
  %v318 = vld [vmem:[%s1 + $0x950] sm:$0xff]
  %v319 = vld [vmem:[%s1 + $0x958] sm:$0xff]
  %v320 = vld [vmem:[%s1 + $0x960] sm:$0xff]
  %v321 = vld [vmem:[%s1 + $0x968] sm:$0xff]
  %v322 = vld [vmem:[%s1 + $0x970] sm:$0xff]
  %v323 = vld [vmem:[%s1 + $0x978] sm:$0xff]
  %v324 = vld [vmem:[%s1 + $0x980] sm:$0xff]
  %v325 = vld [vmem:[%s1 + $0x988] sm:$0xff]
  %v326 = vld [vmem:[%s1 + $0x990] sm:$0xff]
  %v327 = vld [vmem:[%s1 + $0x998] sm:$0xff]
  %v328 = vld [vmem:[%s1 + $0x9a0] sm:$0xff]
  %v329 = vld [vmem:[%s1 + $0x9a8] sm:$0xff]
  %v330 = vld [vmem:[%s1 + $0x9b0] sm:$0xff]
  %v331 = vld [vmem:[%s1 + $0x9b8] sm:$0xff]
  %v332 = vld [vmem:[%s1 + $0x9c0] sm:$0xff]
  %v333 = vld [vmem:[%s1 + $0x9c8] sm:$0xff]
  %v334 = vld [vmem:[%s1 + $0x9d0] sm:$0xff]
  %v335 = vld [vmem:[%s1 + $0x9d8] sm:$0xff]
  %v336 = vld [vmem:[%s1 + $0x9e0] sm:$0xff]
  %v337 = vld [vmem:[%s1 + $0x9e8] sm:$0xff]
  %v338 = vld [vmem:[%s1 + $0x9f0] sm:$0xff]
  %v339 = vld [vmem:[%s1 + $0x9f8] sm:$0xff]
  %v340 = vld [vmem:[%s1 + $0xa00] sm:$0xff]
  %v341 = vld [vmem:[%s1 + $0xa08] sm:$0xff]
  %v342 = vld [vmem:[%s1 + $0xa10] sm:$0xff]
  %v343 = vld [vmem:[%s1 + $0xa18] sm:$0xff]
  %v344 = vld [vmem:[%s1 + $0xa20] sm:$0xff]
  %v345 = vld [vmem:[%s1 + $0xa28] sm:$0xff]
  %v346 = vld [vmem:[%s1 + $0xa30] sm:$0xff]
  %v347 = vld [vmem:[%s1 + $0xa38] sm:$0xff]
  %v348 = vld [vmem:[%s1 + $0xa40] sm:$0xff]
  %v349 = vld [vmem:[%s1 + $0xa48] sm:$0xff]
  %v350 = vld [vmem:[%s1 + $0xa50] sm:$0xff]
  %v351 = vld [vmem:[%s1 + $0xa58] sm:$0xff]
  %v352 = vld [vmem:[%s1 + $0xa60] sm:$0xff]
  %v353 = vld [vmem:[%s1 + $0xa68] sm:$0xff]
  %v354 = vld [vmem:[%s1 + $0xa70] sm:$0xff]
  %v355 = vld [vmem:[%s1 + $0xa78] sm:$0xff]
  %v356 = vld [vmem:[%s1 + $0xa80] sm:$0xff]
  %v357 = vld [vmem:[%s1 + $0xa88] sm:$0xff]
  %v358 = vld [vmem:[%s1 + $0xa90] sm:$0xff]
  %v359 = vld [vmem:[%s1 + $0xa98] sm:$0xff]
  %v360 = vld [vmem:[%s1 + $0xaa0] sm:$0xff]
  %v361 = vld [vmem:[%s1 + $0xaa8] sm:$0xff]
  %v362 = vld [vmem:[%s1 + $0xab0] sm:$0xff]
  %v363 = vld [vmem:[%s1 + $0xab8] sm:$0xff]
  %v364 = vld [vmem:[%s1 + $0xac0] sm:$0xff]
  %v365 = vld [vmem:[%s1 + $0xac8] sm:$0xff]
  %v366 = vld [vmem:[%s1 + $0xad0] sm:$0xff]
  %v367 = vld [vmem:[%s1 + $0xad8] sm:$0xff]
  %v368 = vld [vmem:[%s1 + $0xae0] sm:$0xff]
  %v369 = vld [vmem:[%s1 + $0xae8] sm:$0xff]
  %v370 = vld [vmem:[%s1 + $0xaf0] sm:$0xff]
  %v371 = vld [vmem:[%s1 + $0xaf8] sm:$0xff]
  %v372 = vld [vmem:[%s1 + $0xb00] sm:$0xff]
  %v373 = vld [vmem:[%s1 + $0xb08] sm:$0xff]
  %v374 = vld [vmem:[%s1 + $0xb10] sm:$0xff]
  %v375 = vld [vmem:[%s1 + $0xb18] sm:$0xff]
  %v376 = vld [vmem:[%s1 + $0xb20] sm:$0xff]
  %v377 = vld [vmem:[%s1 + $0xb28] sm:$0xff]
  %v378 = vld [vmem:[%s1 + $0xb30] sm:$0xff]
  %v379 = vld [vmem:[%s1 + $0xb38] sm:$0xff]
  %v380 = vld [vmem:[%s1 + $0xb40] sm:$0xff]
  %v381 = vld [vmem:[%s1 + $0xb48] sm:$0xff]
  %v382 = vld [vmem:[%s1 + $0xb50] sm:$0xff]
  %v383 = vld [vmem:[%s1 + $0xb58] sm:$0xff]
  %v384 = vld [vmem:[%s1 + $0xb60] sm:$0xff]
  %v385 = vld [vmem:[%s1 + $0xb68] sm:$0xff]
  %v386 = vld [vmem:[%s1 + $0xb70] sm:$0xff]
  %v387 = vld [vmem:[%s1 + $0xb78] sm:$0xff]
  %v388 = vld [vmem:[%s2] sm:$0x1]
  %v390 = vlaneseq
  %v391 = vshrl.u32 %v390, 7
  %v392 = vsub.s32 0, %v391
  %v393 = vrot.slane %v388, %v392
  %v401 = vcombine.high %v14, %v14
  %v403 = vunpack.c.l.s4 1983009808
  %v404 = vunpack.c.0.s8 %v403
  %v405 = vlaneseq
  %v406 = vshrl.u32 %v405, 7
  %v407 = vsub.s32 %v404, %v406
  %v408 = vrot.slane %v14, %v407
  %v410 = vunpack.c.l.s4 1983009808
  %v411 = vunpack.c.0.s8 %v410
  %v412 = vlaneseq
  %v413 = vshrl.u32 %v412, 7
  %v414 = vsub.s32 %v411, %v413
  %v415 = vrot.slane %v401, %v414
  %v416 = vcombine.high %v408, %v408
  %v417 = vcombine.high %v415, %v415
  %v418 = vcombine.high %v15, %v15
  %v420 = vunpack.c.l.s4 1983009808
  %v421 = vunpack.c.0.s8 %v420
  %v422 = vlaneseq
  %v423 = vshrl.u32 %v422, 7
  %v424 = vsub.s32 %v421, %v423
  %v425 = vrot.slane %v15, %v424
  %v427 = vunpack.c.l.s4 1983009808
  %v428 = vunpack.c.0.s8 %v427
  %v429 = vlaneseq
  %v430 = vshrl.u32 %v429, 7
  %v431 = vsub.s32 %v428, %v430
  %v432 = vrot.slane %v418, %v431
  %v433 = vcombine.high %v425, %v425
  %v434 = vcombine.high %v432, %v432
  %v435 = vcombine.high %v16, %v16
  %v437 = vunpack.c.l.s4 1983009808
  %v438 = vunpack.c.0.s8 %v437
  %v439 = vlaneseq
  %v440 = vshrl.u32 %v439, 7
  %v441 = vsub.s32 %v438, %v440
  %v442 = vrot.slane %v16, %v441
  %v444 = vunpack.c.l.s4 1983009808
  %v445 = vunpack.c.0.s8 %v444
  %v446 = vlaneseq
  %v447 = vshrl.u32 %v446, 7
  %v448 = vsub.s32 %v445, %v447
  %v449 = vrot.slane %v435, %v448
  %v450 = vcombine.high %v442, %v442
  %v451 = vcombine.high %v449, %v449
  %v452 = vcombine.high %v17, %v17
  %v454 = vunpack.c.l.s4 1983009808
  %v455 = vunpack.c.0.s8 %v454
  %v456 = vlaneseq
  %v457 = vshrl.u32 %v456, 7
  %v458 = vsub.s32 %v455, %v457
  %v459 = vrot.slane %v17, %v458
  %v461 = vunpack.c.l.s4 1983009808
  %v462 = vunpack.c.0.s8 %v461
  %v463 = vlaneseq
  %v464 = vshrl.u32 %v463, 7
  %v465 = vsub.s32 %v462, %v464
  %v466 = vrot.slane %v452, %v465
  %v467 = vcombine.high %v459, %v459
  %v468 = vcombine.high %v466, %v466
  %v469 = vcombine.high %v18, %v18
  %v471 = vunpack.c.l.s4 1983009808
  %v472 = vunpack.c.0.s8 %v471
  %v473 = vlaneseq
  %v474 = vshrl.u32 %v473, 7
  %v475 = vsub.s32 %v472, %v474
  %v476 = vrot.slane %v18, %v475
  %v478 = vunpack.c.l.s4 1983009808
  %v479 = vunpack.c.0.s8 %v478
  %v480 = vlaneseq
  %v481 = vshrl.u32 %v480, 7
  %v482 = vsub.s32 %v479, %v481
  %v483 = vrot.slane %v469, %v482
  %v484 = vcombine.high %v476, %v476
  %v485 = vcombine.high %v483, %v483
  %v486 = vcombine.high %v19, %v19
  %v488 = vunpack.c.l.s4 1983009808
  %v489 = vunpack.c.0.s8 %v488
  %v490 = vlaneseq
  %v491 = vshrl.u32 %v490, 7
  %v492 = vsub.s32 %v489, %v491
  %v493 = vrot.slane %v19, %v492
  %v495 = vunpack.c.l.s4 1983009808
  %v496 = vunpack.c.0.s8 %v495
  %v497 = vlaneseq
  %v498 = vshrl.u32 %v497, 7
  %v499 = vsub.s32 %v496, %v498
  %v500 = vrot.slane %v486, %v499
  %v501 = vcombine.high %v493, %v493
  %525 = vmatprep.subr.mxu0 0.0
  %526 = vmatpush1.msra.mxu0 %v20
  %527 = vmatprep.subr.mxu0 0.0
  %528 = vmatpush1.msra.mxu0 %v21
  %529 = vmatprep.subr.mxu0 0.0
  %530 = vmatpush1.msra.mxu0 %v22
  %531 = vmatprep.subr.mxu0 0.0
  %532 = vmatpush1.msra.mxu0 %v23
  %533 = vmatprep.subr.mxu0 0.0
  %534 = vmatpush1.msra.mxu0 %v24
  %535 = vmatprep.subr.mxu0 0.0
  %536 = vmatpush1.msra.mxu0 %v25
  %537 = vmatprep.subr.mxu0 0.0
  %538 = vmatpush1.msra.mxu0 %v26
  %539 = vmatprep.subr.mxu0 0.0
  %540 = vmatpush1.msra.mxu0 %v27
  %541 = vmatprep.subr.mxu0 0.0
  %542 = vmatpush1.msra.mxu0 %v28
  %543 = vmatprep.subr.mxu0 0.0
  %544 = vmatpush1.msra.mxu0 %v29
  %545 = vmatprep.subr.mxu0 0.0
  %546 = vmatpush1.msra.mxu0 %v30
  %547 = vmatprep.subr.mxu0 0.0
  %548 = vmatpush1.msra.mxu0 %v31
  %549 = vmatprep.subr.mxu0 0.0
  %550 = vmatpush1.msra.mxu0 %v32
  %551 = vmatprep.subr.mxu0 0.0
  %552 = vmatpush1.msra.mxu0 %v33
  %553 = vmatprep.subr.mxu0 0.0
  %554 = vmatpush1.msra.mxu0 %v34
  %555 = vmatprep.subr.mxu0 0.0
  %556 = vmatpush1.msra.mxu0 %v35
  %557 = vmatprep.subr.mxu0 0.0
  %558 = vmatpush1.msra.mxu0 %v36
  %559 = vmatprep.subr.mxu0 0.0
  %560 = vmatpush1.msra.mxu0 %v37
  %561 = vmatprep.subr.mxu0 0.0
  %562 = vmatpush1.msra.mxu0 %v38
  %563 = vmatprep.subr.mxu0 0.0
  %564 = vmatpush1.msra.mxu0 %v39
  %565 = vmatprep.subr.mxu0 0.0
  %566 = vmatpush1.msra.mxu0 %v40
  %567 = vmatprep.subr.mxu0 0.0
  %568 = vmatpush1.msra.mxu0 %v41
  %569 = vmatprep.subr.mxu0 0.0
  %570 = vmatpush1.msra.mxu0 %v42
  %571 = vmatprep.subr.mxu0 0.0
  %572 = vmatpush1.msra.mxu0 %v43
  %573 = vmatprep.subr.mxu0 0.0
  %574 = vmatpush1.msra.mxu0 %v44
  %575 = vmatprep.subr.mxu0 0.0
  %576 = vmatpush1.msra.mxu0 %v45
  %577 = vmatprep.subr.mxu0 0.0
  %578 = vmatpush1.msra.mxu0 %v46
  %579 = vmatprep.subr.mxu0 0.0
  %580 = vmatpush1.msra.mxu0 %v47
  %581 = vmatprep.subr.mxu0 0.0
  %582 = vmatpush1.msra.mxu0 %v48
  %583 = vmatprep.subr.mxu0 0.0
  %584 = vmatpush1.msra.mxu0 %v49
  %585 = vmatprep.subr.mxu0 0.0
  %586 = vmatpush1.msra.mxu0 %v50
  %587 = vmatprep.subr.mxu0 0.0
  %588 = vmatpush1.msra.mxu0 %v51
  %589 = vmatprep.mubr.f32.mxu0 %v416
  %590 = vmatmul.mubr.f32.gmra.mrb[0].mxu0 %v408
  %v591 = vpop.f32.mrb[0].mxu0
  %v592 = vadd.f32 %v393, %v591
  %v593 = vpop.f32.mrb[0].mxu0
  %594 = vdwg.mxu0
  %595 = vmatprep.subr.mxu0 0.0
  %596 = vmatpush1.msra.mxu0 %v52
  %597 = vmatprep.subr.mxu0 0.0
  %598 = vmatpush1.msra.mxu0 %v53
  %599 = vmatprep.subr.mxu0 0.0
  %600 = vmatpush1.msra.mxu0 %v54
  %601 = vmatprep.subr.mxu0 0.0
  %602 = vmatpush1.msra.mxu0 %v55
  %603 = vmatprep.subr.mxu0 0.0
  %604 = vmatpush1.msra.mxu0 %v56
  %605 = vmatprep.subr.mxu0 0.0
  %606 = vmatpush1.msra.mxu0 %v57
  %607 = vmatprep.subr.mxu0 0.0
  %608 = vmatpush1.msra.mxu0 %v58
  %609 = vmatprep.subr.mxu0 0.0
  %610 = vmatpush1.msra.mxu0 %v59
  %611 = vmatprep.subr.mxu0 0.0
  %612 = vmatpush1.msra.mxu0 %v60
  %613 = vmatprep.subr.mxu0 0.0
  %614 = vmatpush1.msra.mxu0 %v61
  %615 = vmatprep.subr.mxu0 0.0
  %616 = vmatpush1.msra.mxu0 %v62
  %617 = vmatprep.subr.mxu0 0.0
  %618 = vmatpush1.msra.mxu0 %v63
  %619 = vmatprep.subr.mxu0 0.0
  %620 = vmatpush1.msra.mxu0 %v64
  %621 = vmatprep.subr.mxu0 0.0
  %622 = vmatpush1.msra.mxu0 %v65
  %623 = vmatprep.subr.mxu0 0.0
  %624 = vmatpush1.msra.mxu0 %v66
  %625 = vmatprep.subr.mxu0 0.0
  %626 = vmatpush1.msra.mxu0 %v67
  %627 = vmatprep.subr.mxu0 0.0
  %628 = vmatpush1.msra.mxu0 %v68
  %629 = vmatprep.subr.mxu0 0.0
  %630 = vmatpush1.msra.mxu0 %v69
  %631 = vmatprep.subr.mxu0 0.0
  %632 = vmatpush1.msra.mxu0 %v70
  %633 = vmatprep.subr.mxu0 0.0
  %634 = vmatpush1.msra.mxu0 %v71
  %635 = vmatprep.subr.mxu0 0.0
  %636 = vmatpush1.msra.mxu0 %v72
  %637 = vmatprep.subr.mxu0 0.0
  %638 = vmatpush1.msra.mxu0 %v73
  %639 = vmatprep.subr.mxu0 0.0
  %640 = vmatpush1.msra.mxu0 %v74
  %641 = vmatprep.subr.mxu0 0.0
  %642 = vmatpush1.msra.mxu0 %v75
  %643 = vmatprep.subr.mxu0 0.0
  %644 = vmatpush1.msra.mxu0 %v76
  %645 = vmatprep.subr.mxu0 0.0
  %646 = vmatpush1.msra.mxu0 %v77
  %647 = vmatprep.subr.mxu0 0.0
  %648 = vmatpush1.msra.mxu0 %v78
  %649 = vmatprep.subr.mxu0 0.0
  %650 = vmatpush1.msra.mxu0 %v79
  %651 = vmatprep.subr.mxu0 0.0
  %652 = vmatpush1.msra.mxu0 %v80
  %653 = vmatprep.subr.mxu0 0.0
  %654 = vmatpush1.msra.mxu0 %v81
  %655 = vmatprep.subr.mxu0 0.0
  %656 = vmatpush1.msra.mxu0 %v82
  %657 = vmatprep.subr.mxu0 0.0
  %658 = vmatpush1.msra.mxu0 %v83
  %659 = vmatprep.mubr.f32.mxu0 %v417
  %660 = vmatmul.mubr.f32.gmra.mrb[0].mxu0 %v415
  %v661 = vpop.f32.mrb[0].mxu0
  %v662 = vadd.f32 %v592, %v661
  %v663 = vpop.f32.mrb[0].mxu0
  %664 = vdwg.mxu0
  %665 = vmatprep.subr.mxu0 0.0
  %666 = vmatpush1.msra.mxu0 %v84
  %667 = vmatprep.subr.mxu0 0.0
  %668 = vmatpush1.msra.mxu0 %v85
  %669 = vmatprep.subr.mxu0 0.0
  %670 = vmatpush1.msra.mxu0 %v86
  %671 = vmatprep.subr.mxu0 0.0
  %672 = vmatpush1.msra.mxu0 %v87
  %673 = vmatprep.subr.mxu0 0.0
  %674 = vmatpush1.msra.mxu0 %v88
  %675 = vmatprep.subr.mxu0 0.0
  %676 = vmatpush1.msra.mxu0 %v89
  %677 = vmatprep.subr.mxu0 0.0
  %678 = vmatpush1.msra.mxu0 %v90
  %679 = vmatprep.subr.mxu0 0.0
  %680 = vmatpush1.msra.mxu0 %v91
  %681 = vmatprep.subr.mxu0 0.0
  %682 = vmatpush1.msra.mxu0 %v92
  %683 = vmatprep.subr.mxu0 0.0
  %684 = vmatpush1.msra.mxu0 %v93
  %685 = vmatprep.subr.mxu0 0.0
  %686 = vmatpush1.msra.mxu0 %v94
  %687 = vmatprep.subr.mxu0 0.0
  %688 = vmatpush1.msra.mxu0 %v95
  %689 = vmatprep.subr.mxu0 0.0
  %690 = vmatpush1.msra.mxu0 %v96
  %691 = vmatprep.subr.mxu0 0.0
  %692 = vmatpush1.msra.mxu0 %v97
  %693 = vmatprep.subr.mxu0 0.0
  %694 = vmatpush1.msra.mxu0 %v98
  %695 = vmatprep.subr.mxu0 0.0
  %696 = vmatpush1.msra.mxu0 %v99
  %697 = vmatprep.subr.mxu0 0.0
  %698 = vmatpush1.msra.mxu0 %v100
  %699 = vmatprep.subr.mxu0 0.0
  %700 = vmatpush1.msra.mxu0 %v101
  %701 = vmatprep.subr.mxu0 0.0
  %702 = vmatpush1.msra.mxu0 %v102
  %703 = vmatprep.subr.mxu0 0.0
  %704 = vmatpush1.msra.mxu0 %v103
  %705 = vmatprep.subr.mxu0 0.0
  %706 = vmatpush1.msra.mxu0 %v104
  %707 = vmatprep.subr.mxu0 0.0
  %708 = vmatpush1.msra.mxu0 %v105
  %709 = vmatprep.subr.mxu0 0.0
  %710 = vmatpush1.msra.mxu0 %v106
  %711 = vmatprep.subr.mxu0 0.0
  %712 = vmatpush1.msra.mxu0 %v107
  %713 = vmatprep.subr.mxu0 0.0
  %714 = vmatpush1.msra.mxu0 %v108
  %715 = vmatprep.subr.mxu0 0.0
  %716 = vmatpush1.msra.mxu0 %v109
  %717 = vmatprep.subr.mxu0 0.0
  %718 = vmatpush1.msra.mxu0 %v110
  %719 = vmatprep.subr.mxu0 0.0
  %720 = vmatpush1.msra.mxu0 %v111
  %721 = vmatprep.subr.mxu0 0.0
  %722 = vmatpush1.msra.mxu0 %v112
  %723 = vmatprep.subr.mxu0 0.0
  %724 = vmatpush1.msra.mxu0 %v113
  %725 = vmatprep.subr.mxu0 0.0
  %726 = vmatpush1.msra.mxu0 %v114
  %727 = vmatprep.subr.mxu0 0.0
  %728 = vmatpush1.msra.mxu0 %v115
  %729 = vmatprep.mubr.f32.mxu0 %v433
  %730 = vmatmul.mubr.f32.gmra.mrb[0].mxu0 %v425
  %v731 = vpop.f32.mrb[0].mxu0
  %v732 = vadd.f32 %v662, %v731
  %v733 = vpop.f32.mrb[0].mxu0
  %734 = vdwg.mxu0
  %735 = vmatprep.subr.mxu0 0.0
  %736 = vmatpush1.msra.mxu0 %v116
  %737 = vmatprep.subr.mxu0 0.0
  %738 = vmatpush1.msra.mxu0 %v117
  %739 = vmatprep.subr.mxu0 0.0
  %740 = vmatpush1.msra.mxu0 %v118
  %741 = vmatprep.subr.mxu0 0.0
  %742 = vmatpush1.msra.mxu0 %v119
  %743 = vmatprep.subr.mxu0 0.0
  %744 = vmatpush1.msra.mxu0 %v120
  %745 = vmatprep.subr.mxu0 0.0
  %746 = vmatpush1.msra.mxu0 %v121
  %747 = vmatprep.subr.mxu0 0.0
  %748 = vmatpush1.msra.mxu0 %v122
  %749 = vmatprep.subr.mxu0 0.0
  %750 = vmatpush1.msra.mxu0 %v123
  %751 = vmatprep.subr.mxu0 0.0
  %752 = vmatpush1.msra.mxu0 %v124
  %753 = vmatprep.subr.mxu0 0.0
  %754 = vmatpush1.msra.mxu0 %v125
  %755 = vmatprep.subr.mxu0 0.0
  %756 = vmatpush1.msra.mxu0 %v126
  %757 = vmatprep.subr.mxu0 0.0
  %758 = vmatpush1.msra.mxu0 %v127
  %759 = vmatprep.subr.mxu0 0.0
  %760 = vmatpush1.msra.mxu0 %v128
  %761 = vmatprep.subr.mxu0 0.0
  %762 = vmatpush1.msra.mxu0 %v129
  %763 = vmatprep.subr.mxu0 0.0
  %764 = vmatpush1.msra.mxu0 %v130
  %765 = vmatprep.subr.mxu0 0.0
  %766 = vmatpush1.msra.mxu0 %v131
  %767 = vmatprep.subr.mxu0 0.0
  %768 = vmatpush1.msra.mxu0 %v132
  %769 = vmatprep.subr.mxu0 0.0
  %770 = vmatpush1.msra.mxu0 %v133
  %771 = vmatprep.subr.mxu0 0.0
  %772 = vmatpush1.msra.mxu0 %v134
  %773 = vmatprep.subr.mxu0 0.0
  %774 = vmatpush1.msra.mxu0 %v135
  %775 = vmatprep.subr.mxu0 0.0
  %776 = vmatpush1.msra.mxu0 %v136
  %777 = vmatprep.subr.mxu0 0.0
  %778 = vmatpush1.msra.mxu0 %v137
  %779 = vmatprep.subr.mxu0 0.0
  %780 = vmatpush1.msra.mxu0 %v138
  %781 = vmatprep.subr.mxu0 0.0
  %782 = vmatpush1.msra.mxu0 %v139
  %783 = vmatprep.subr.mxu0 0.0
  %784 = vmatpush1.msra.mxu0 %v140
  %785 = vmatprep.subr.mxu0 0.0
  %786 = vmatpush1.msra.mxu0 %v141
  %787 = vmatprep.subr.mxu0 0.0
  %788 = vmatpush1.msra.mxu0 %v142
  %789 = vmatprep.subr.mxu0 0.0
  %790 = vmatpush1.msra.mxu0 %v143
  %791 = vmatprep.subr.mxu0 0.0
  %792 = vmatpush1.msra.mxu0 %v144
  %793 = vmatprep.subr.mxu0 0.0
  %794 = vmatpush1.msra.mxu0 %v145
  %795 = vmatprep.subr.mxu0 0.0
  %796 = vmatpush1.msra.mxu0 %v146
  %797 = vmatprep.subr.mxu0 0.0
  %798 = vmatpush1.msra.mxu0 %v147
  %799 = vmatprep.mubr.f32.mxu0 %v434
  %800 = vmatmul.mubr.f32.gmra.mrb[0].mxu0 %v432
  %v801 = vpop.f32.mrb[0].mxu0
  %v802 = vadd.f32 %v732, %v801
  %v803 = vpop.f32.mrb[0].mxu0
  %804 = vdwg.mxu0
  %805 = vmatprep.subr.mxu0 0.0
  %806 = vmatpush1.msra.mxu0 %v148
  %807 = vmatprep.subr.mxu0 0.0
  %808 = vmatpush1.msra.mxu0 %v149
  %809 = vmatprep.subr.mxu0 0.0
  %810 = vmatpush1.msra.mxu0 %v150
  %811 = vmatprep.subr.mxu0 0.0
  %812 = vmatpush1.msra.mxu0 %v151
  %813 = vmatprep.subr.mxu0 0.0
  %814 = vmatpush1.msra.mxu0 %v152
  %815 = vmatprep.subr.mxu0 0.0
  %816 = vmatpush1.msra.mxu0 %v153
  %817 = vmatprep.subr.mxu0 0.0
  %818 = vmatpush1.msra.mxu0 %v154
  %819 = vmatprep.subr.mxu0 0.0
  %820 = vmatpush1.msra.mxu0 %v155
  %821 = vmatprep.subr.mxu0 0.0
  %822 = vmatpush1.msra.mxu0 %v156
  %823 = vmatprep.subr.mxu0 0.0
  %824 = vmatpush1.msra.mxu0 %v157
  %825 = vmatprep.subr.mxu0 0.0
  %826 = vmatpush1.msra.mxu0 %v158
  %827 = vmatprep.subr.mxu0 0.0
  %828 = vmatpush1.msra.mxu0 %v159
  %829 = vmatprep.subr.mxu0 0.0
  %830 = vmatpush1.msra.mxu0 %v160
  %831 = vmatprep.subr.mxu0 0.0
  %832 = vmatpush1.msra.mxu0 %v161
  %833 = vmatprep.subr.mxu0 0.0
  %834 = vmatpush1.msra.mxu0 %v162
  %835 = vmatprep.subr.mxu0 0.0
  %836 = vmatpush1.msra.mxu0 %v163
  %837 = vmatprep.subr.mxu0 0.0
  %838 = vmatpush1.msra.mxu0 %v164
  %839 = vmatprep.subr.mxu0 0.0
  %840 = vmatpush1.msra.mxu0 %v165
  %841 = vmatprep.subr.mxu0 0.0
  %842 = vmatpush1.msra.mxu0 %v166
  %843 = vmatprep.subr.mxu0 0.0
  %844 = vmatpush1.msra.mxu0 %v167
  %845 = vmatprep.subr.mxu0 0.0
  %846 = vmatpush1.msra.mxu0 %v168
  %847 = vmatprep.subr.mxu0 0.0
  %848 = vmatpush1.msra.mxu0 %v169
  %849 = vmatprep.subr.mxu0 0.0
  %850 = vmatpush1.msra.mxu0 %v170
  %851 = vmatprep.subr.mxu0 0.0
  %852 = vmatpush1.msra.mxu0 %v171
  %853 = vmatprep.subr.mxu0 0.0
  %854 = vmatpush1.msra.mxu0 %v172
  %855 = vmatprep.subr.mxu0 0.0
  %856 = vmatpush1.msra.mxu0 %v173
  %857 = vmatprep.subr.mxu0 0.0
  %858 = vmatpush1.msra.mxu0 %v174
  %859 = vmatprep.subr.mxu0 0.0
  %860 = vmatpush1.msra.mxu0 %v175
  %861 = vmatprep.subr.mxu0 0.0
  %862 = vmatpush1.msra.mxu0 %v176
  %863 = vmatprep.subr.mxu0 0.0
  %864 = vmatpush1.msra.mxu0 %v177
  %865 = vmatprep.subr.mxu0 0.0
  %866 = vmatpush1.msra.mxu0 %v178
  %867 = vmatprep.subr.mxu0 0.0
  %868 = vmatpush1.msra.mxu0 %v179
  %869 = vmatprep.mubr.f32.mxu0 %v450
  %870 = vmatmul.mubr.f32.gmra.mrb[0].mxu0 %v442
  %v871 = vpop.f32.mrb[0].mxu0
  %v872 = vadd.f32 %v802, %v871
  %v873 = vpop.f32.mrb[0].mxu0
  %874 = vdwg.mxu0
  %875 = vmatprep.subr.mxu0 0.0
  %876 = vmatpush1.msra.mxu0 %v180
  %877 = vmatprep.subr.mxu0 0.0
  %878 = vmatpush1.msra.mxu0 %v181
  %879 = vmatprep.subr.mxu0 0.0
  %880 = vmatpush1.msra.mxu0 %v182
  %881 = vmatprep.subr.mxu0 0.0
  %882 = vmatpush1.msra.mxu0 %v183
  %883 = vmatprep.subr.mxu0 0.0
  %884 = vmatpush1.msra.mxu0 %v184
  %885 = vmatprep.subr.mxu0 0.0
  %886 = vmatpush1.msra.mxu0 %v185
  %887 = vmatprep.subr.mxu0 0.0
  %888 = vmatpush1.msra.mxu0 %v186
  %889 = vmatprep.subr.mxu0 0.0
  %890 = vmatpush1.msra.mxu0 %v187
  %891 = vmatprep.subr.mxu0 0.0
  %892 = vmatpush1.msra.mxu0 %v188
  %893 = vmatprep.subr.mxu0 0.0
  %894 = vmatpush1.msra.mxu0 %v189
  %895 = vmatprep.subr.mxu0 0.0
  %896 = vmatpush1.msra.mxu0 %v190
  %897 = vmatprep.subr.mxu0 0.0
  %898 = vmatpush1.msra.mxu0 %v191
  %899 = vmatprep.subr.mxu0 0.0
  %900 = vmatpush1.msra.mxu0 %v192
  %901 = vmatprep.subr.mxu0 0.0
  %902 = vmatpush1.msra.mxu0 %v193
  %903 = vmatprep.subr.mxu0 0.0
  %904 = vmatpush1.msra.mxu0 %v194
  %905 = vmatprep.subr.mxu0 0.0
  %906 = vmatpush1.msra.mxu0 %v195
  %907 = vmatprep.subr.mxu0 0.0
  %908 = vmatpush1.msra.mxu0 %v196
  %909 = vmatprep.subr.mxu0 0.0
  %910 = vmatpush1.msra.mxu0 %v197
  %911 = vmatprep.subr.mxu0 0.0
  %912 = vmatpush1.msra.mxu0 %v198
  %913 = vmatprep.subr.mxu0 0.0
  %914 = vmatpush1.msra.mxu0 %v199
  %915 = vmatprep.subr.mxu0 0.0
  %916 = vmatpush1.msra.mxu0 %v200
  %917 = vmatprep.subr.mxu0 0.0
  %918 = vmatpush1.msra.mxu0 %v201
  %919 = vmatprep.subr.mxu0 0.0
  %920 = vmatpush1.msra.mxu0 %v202
  %921 = vmatprep.subr.mxu0 0.0
  %922 = vmatpush1.msra.mxu0 %v203
  %923 = vmatprep.subr.mxu0 0.0
  %924 = vmatpush1.msra.mxu0 %v204
  %925 = vmatprep.subr.mxu0 0.0
  %926 = vmatpush1.msra.mxu0 %v205
  %927 = vmatprep.subr.mxu0 0.0
  %928 = vmatpush1.msra.mxu0 %v206
  %929 = vmatprep.subr.mxu0 0.0
  %930 = vmatpush1.msra.mxu0 %v207
  %931 = vmatprep.subr.mxu0 0.0
  %932 = vmatpush1.msra.mxu0 %v208
  %933 = vmatprep.subr.mxu0 0.0
  %934 = vmatpush1.msra.mxu0 %v209
  %935 = vmatprep.subr.mxu0 0.0
  %936 = vmatpush1.msra.mxu0 %v210
  %937 = vmatprep.subr.mxu0 0.0
  %938 = vmatpush1.msra.mxu0 %v211
  %939 = vmatprep.mubr.f32.mxu0 %v451
  %940 = vmatmul.mubr.f32.gmra.mrb[0].mxu0 %v449
  %v941 = vpop.f32.mrb[0].mxu0
  %v942 = vadd.f32 %v872, %v941
  %v943 = vpop.f32.mrb[0].mxu0
  %944 = vdwg.mxu0
  %945 = vmatprep.subr.mxu0 0.0
  %946 = vmatpush1.msra.mxu0 %v212
  %947 = vmatprep.subr.mxu0 0.0
  %948 = vmatpush1.msra.mxu0 %v213
  %949 = vmatprep.subr.mxu0 0.0
  %950 = vmatpush1.msra.mxu0 %v214
  %951 = vmatprep.subr.mxu0 0.0
  %952 = vmatpush1.msra.mxu0 %v215
  %953 = vmatprep.subr.mxu0 0.0
  %954 = vmatpush1.msra.mxu0 %v216
  %955 = vmatprep.subr.mxu0 0.0
  %956 = vmatpush1.msra.mxu0 %v217
  %957 = vmatprep.subr.mxu0 0.0
  %958 = vmatpush1.msra.mxu0 %v218
  %959 = vmatprep.subr.mxu0 0.0
  %960 = vmatpush1.msra.mxu0 %v219
  %961 = vmatprep.subr.mxu0 0.0
  %962 = vmatpush1.msra.mxu0 %v220
  %963 = vmatprep.subr.mxu0 0.0
  %964 = vmatpush1.msra.mxu0 %v221
  %965 = vmatprep.subr.mxu0 0.0
  %966 = vmatpush1.msra.mxu0 %v222
  %967 = vmatprep.subr.mxu0 0.0
  %968 = vmatpush1.msra.mxu0 %v223
  %969 = vmatprep.subr.mxu0 0.0
  %970 = vmatpush1.msra.mxu0 %v224
  %971 = vmatprep.subr.mxu0 0.0
  %972 = vmatpush1.msra.mxu0 %v225
  %973 = vmatprep.subr.mxu0 0.0
  %974 = vmatpush1.msra.mxu0 %v226
  %975 = vmatprep.subr.mxu0 0.0
  %976 = vmatpush1.msra.mxu0 %v227
  %977 = vmatprep.subr.mxu0 0.0
  %978 = vmatpush1.msra.mxu0 %v228
  %979 = vmatprep.subr.mxu0 0.0
  %980 = vmatpush1.msra.mxu0 %v229
  %981 = vmatprep.subr.mxu0 0.0
  %982 = vmatpush1.msra.mxu0 %v230
  %983 = vmatprep.subr.mxu0 0.0
  %984 = vmatpush1.msra.mxu0 %v231
  %985 = vmatprep.subr.mxu0 0.0
  %986 = vmatpush1.msra.mxu0 %v232
  %987 = vmatprep.subr.mxu0 0.0
  %988 = vmatpush1.msra.mxu0 %v233
  %989 = vmatprep.subr.mxu0 0.0
  %990 = vmatpush1.msra.mxu0 %v234
  %991 = vmatprep.subr.mxu0 0.0
  %992 = vmatpush1.msra.mxu0 %v235
  %993 = vmatprep.subr.mxu0 0.0
  %994 = vmatpush1.msra.mxu0 %v236
  %995 = vmatprep.subr.mxu0 0.0
  %996 = vmatpush1.msra.mxu0 %v237
  %997 = vmatprep.subr.mxu0 0.0
  %998 = vmatpush1.msra.mxu0 %v238
  %999 = vmatprep.subr.mxu0 0.0
  %1000 = vmatpush1.msra.mxu0 %v239
  %1001 = vmatprep.subr.mxu0 0.0
  %1002 = vmatpush1.msra.mxu0 %v240
  %1003 = vmatprep.subr.mxu0 0.0
  %1004 = vmatpush1.msra.mxu0 %v241
  %1005 = vmatprep.subr.mxu0 0.0
  %1006 = vmatpush1.msra.mxu0 %v242
  %1007 = vmatprep.subr.mxu0 0.0
  %1008 = vmatpush1.msra.mxu0 %v243
  %1009 = vmatprep.mubr.f32.mxu0 %v467
  %1010 = vmatmul.mubr.f32.gmra.mrb[0].mxu0 %v459
  %v1011 = vpop.f32.mrb[0].mxu0
  %v1012 = vadd.f32 %v942, %v1011
  %v1013 = vpop.f32.mrb[0].mxu0
  %1014 = vdwg.mxu0
  %1015 = vmatprep.subr.mxu0 0.0
  %1016 = vmatpush1.msra.mxu0 %v244
  %1017 = vmatprep.subr.mxu0 0.0
  %1018 = vmatpush1.msra.mxu0 %v245
  %1019 = vmatprep.subr.mxu0 0.0
  %1020 = vmatpush1.msra.mxu0 %v246
  %1021 = vmatprep.subr.mxu0 0.0
  %1022 = vmatpush1.msra.mxu0 %v247
  %1023 = vmatprep.subr.mxu0 0.0
  %1024 = vmatpush1.msra.mxu0 %v248
  %1025 = vmatprep.subr.mxu0 0.0
  %1026 = vmatpush1.msra.mxu0 %v249
  %1027 = vmatprep.subr.mxu0 0.0
  %1028 = vmatpush1.msra.mxu0 %v250
  %1029 = vmatprep.subr.mxu0 0.0
  %1030 = vmatpush1.msra.mxu0 %v251
  %1031 = vmatprep.subr.mxu0 0.0
  %1032 = vmatpush1.msra.mxu0 %v252
  %1033 = vmatprep.subr.mxu0 0.0
  %1034 = vmatpush1.msra.mxu0 %v253
  %1035 = vmatprep.subr.mxu0 0.0
  %1036 = vmatpush1.msra.mxu0 %v254
  %1037 = vmatprep.subr.mxu0 0.0
  %1038 = vmatpush1.msra.mxu0 %v255
  %1039 = vmatprep.subr.mxu0 0.0
  %1040 = vmatpush1.msra.mxu0 %v256
  %1041 = vmatprep.subr.mxu0 0.0
  %1042 = vmatpush1.msra.mxu0 %v257
  %1043 = vmatprep.subr.mxu0 0.0
  %1044 = vmatpush1.msra.mxu0 %v258
  %1045 = vmatprep.subr.mxu0 0.0
  %1046 = vmatpush1.msra.mxu0 %v259
  %1047 = vmatprep.subr.mxu0 0.0
  %1048 = vmatpush1.msra.mxu0 %v260
  %1049 = vmatprep.subr.mxu0 0.0
  %1050 = vmatpush1.msra.mxu0 %v261
  %1051 = vmatprep.subr.mxu0 0.0
  %1052 = vmatpush1.msra.mxu0 %v262
  %1053 = vmatprep.subr.mxu0 0.0
  %1054 = vmatpush1.msra.mxu0 %v263
  %1055 = vmatprep.subr.mxu0 0.0
  %1056 = vmatpush1.msra.mxu0 %v264
  %1057 = vmatprep.subr.mxu0 0.0
  %1058 = vmatpush1.msra.mxu0 %v265
  %1059 = vmatprep.subr.mxu0 0.0
  %1060 = vmatpush1.msra.mxu0 %v266
  %1061 = vmatprep.subr.mxu0 0.0
  %1062 = vmatpush1.msra.mxu0 %v267
  %1063 = vmatprep.subr.mxu0 0.0
  %1064 = vmatpush1.msra.mxu0 %v268
  %1065 = vmatprep.subr.mxu0 0.0
  %1066 = vmatpush1.msra.mxu0 %v269
  %1067 = vmatprep.subr.mxu0 0.0
  %1068 = vmatpush1.msra.mxu0 %v270
  %1069 = vmatprep.subr.mxu0 0.0
  %1070 = vmatpush1.msra.mxu0 %v271
  %1071 = vmatprep.subr.mxu0 0.0
  %1072 = vmatpush1.msra.mxu0 %v272
  %1073 = vmatprep.subr.mxu0 0.0
  %1074 = vmatpush1.msra.mxu0 %v273
  %1075 = vmatprep.subr.mxu0 0.0
  %1076 = vmatpush1.msra.mxu0 %v274
  %1077 = vmatprep.subr.mxu0 0.0
  %1078 = vmatpush1.msra.mxu0 %v275
  %1079 = vmatprep.mubr.f32.mxu0 %v468
  %1080 = vmatmul.mubr.f32.gmra.mrb[0].mxu0 %v466
  %v1081 = vpop.f32.mrb[0].mxu0
  %v1082 = vadd.f32 %v1012, %v1081
  %v1083 = vpop.f32.mrb[0].mxu0
  %1084 = vdwg.mxu0
  %1085 = vmatprep.subr.mxu0 0.0
  %1086 = vmatpush1.msra.mxu0 %v276
  %1087 = vmatprep.subr.mxu0 0.0
  %1088 = vmatpush1.msra.mxu0 %v277
  %1089 = vmatprep.subr.mxu0 0.0
  %1090 = vmatpush1.msra.mxu0 %v278
  %1091 = vmatprep.subr.mxu0 0.0
  %1092 = vmatpush1.msra.mxu0 %v279
  %1093 = vmatprep.subr.mxu0 0.0
  %1094 = vmatpush1.msra.mxu0 %v280
  %1095 = vmatprep.subr.mxu0 0.0
  %1096 = vmatpush1.msra.mxu0 %v281
  %1097 = vmatprep.subr.mxu0 0.0
  %1098 = vmatpush1.msra.mxu0 %v282
  %1099 = vmatprep.subr.mxu0 0.0
  %1100 = vmatpush1.msra.mxu0 %v283
  %1101 = vmatprep.subr.mxu0 0.0
  %1102 = vmatpush1.msra.mxu0 %v284
  %1103 = vmatprep.subr.mxu0 0.0
  %1104 = vmatpush1.msra.mxu0 %v285
  %1105 = vmatprep.subr.mxu0 0.0
  %1106 = vmatpush1.msra.mxu0 %v286
  %1107 = vmatprep.subr.mxu0 0.0
  %1108 = vmatpush1.msra.mxu0 %v287
  %1109 = vmatprep.subr.mxu0 0.0
  %1110 = vmatpush1.msra.mxu0 %v288
  %1111 = vmatprep.subr.mxu0 0.0
  %1112 = vmatpush1.msra.mxu0 %v289
  %1113 = vmatprep.subr.mxu0 0.0
  %1114 = vmatpush1.msra.mxu0 %v290
  %1115 = vmatprep.subr.mxu0 0.0
  %1116 = vmatpush1.msra.mxu0 %v291
  %1117 = vmatprep.subr.mxu0 0.0
  %1118 = vmatpush1.msra.mxu0 %v292
  %1119 = vmatprep.subr.mxu0 0.0
  %1120 = vmatpush1.msra.mxu0 %v293
  %1121 = vmatprep.subr.mxu0 0.0
  %1122 = vmatpush1.msra.mxu0 %v294
  %1123 = vmatprep.subr.mxu0 0.0
  %1124 = vmatpush1.msra.mxu0 %v295
  %1125 = vmatprep.subr.mxu0 0.0
  %1126 = vmatpush1.msra.mxu0 %v296
  %1127 = vmatprep.subr.mxu0 0.0
  %1128 = vmatpush1.msra.mxu0 %v297
  %1129 = vmatprep.subr.mxu0 0.0
  %1130 = vmatpush1.msra.mxu0 %v298
  %1131 = vmatprep.subr.mxu0 0.0
  %1132 = vmatpush1.msra.mxu0 %v299
  %1133 = vmatprep.subr.mxu0 0.0
  %1134 = vmatpush1.msra.mxu0 %v300
  %1135 = vmatprep.subr.mxu0 0.0
  %1136 = vmatpush1.msra.mxu0 %v301
  %1137 = vmatprep.subr.mxu0 0.0
  %1138 = vmatpush1.msra.mxu0 %v302
  %1139 = vmatprep.subr.mxu0 0.0
  %1140 = vmatpush1.msra.mxu0 %v303
  %1141 = vmatprep.subr.mxu0 0.0
  %1142 = vmatpush1.msra.mxu0 %v304
  %1143 = vmatprep.subr.mxu0 0.0
  %1144 = vmatpush1.msra.mxu0 %v305
  %1145 = vmatprep.subr.mxu0 0.0
  %1146 = vmatpush1.msra.mxu0 %v306
  %1147 = vmatprep.subr.mxu0 0.0
  %1148 = vmatpush1.msra.mxu0 %v307
  %1149 = vmatprep.mubr.f32.mxu0 %v484
  %1150 = vmatmul.mubr.f32.gmra.mrb[0].mxu0 %v476
  %v1151 = vpop.f32.mrb[0].mxu0
  %v1152 = vadd.f32 %v1082, %v1151
  %v1153 = vpop.f32.mrb[0].mxu0
  %1154 = vdwg.mxu0
  %1155 = vmatprep.subr.mxu0 0.0
  %1156 = vmatpush1.msra.mxu0 %v308
  %1157 = vmatprep.subr.mxu0 0.0
  %1158 = vmatpush1.msra.mxu0 %v309
  %1159 = vmatprep.subr.mxu0 0.0
  %1160 = vmatpush1.msra.mxu0 %v310
  %1161 = vmatprep.subr.mxu0 0.0
  %1162 = vmatpush1.msra.mxu0 %v311
  %1163 = vmatprep.subr.mxu0 0.0
  %1164 = vmatpush1.msra.mxu0 %v312
  %1165 = vmatprep.subr.mxu0 0.0
  %1166 = vmatpush1.msra.mxu0 %v313
  %1167 = vmatprep.subr.mxu0 0.0
  %1168 = vmatpush1.msra.mxu0 %v314
  %1169 = vmatprep.subr.mxu0 0.0
  %1170 = vmatpush1.msra.mxu0 %v315
  %1171 = vmatprep.subr.mxu0 0.0
  %1172 = vmatpush1.msra.mxu0 %v316
  %1173 = vmatprep.subr.mxu0 0.0
  %1174 = vmatpush1.msra.mxu0 %v317
  %1175 = vmatprep.subr.mxu0 0.0
  %1176 = vmatpush1.msra.mxu0 %v318
  %1177 = vmatprep.subr.mxu0 0.0
  %1178 = vmatpush1.msra.mxu0 %v319
  %1179 = vmatprep.subr.mxu0 0.0
  %1180 = vmatpush1.msra.mxu0 %v320
  %1181 = vmatprep.subr.mxu0 0.0
  %1182 = vmatpush1.msra.mxu0 %v321
  %1183 = vmatprep.subr.mxu0 0.0
  %1184 = vmatpush1.msra.mxu0 %v322
  %1185 = vmatprep.subr.mxu0 0.0
  %1186 = vmatpush1.msra.mxu0 %v323
  %1187 = vmatprep.subr.mxu0 0.0
  %1188 = vmatpush1.msra.mxu0 %v324
  %1189 = vmatprep.subr.mxu0 0.0
  %1190 = vmatpush1.msra.mxu0 %v325
  %1191 = vmatprep.subr.mxu0 0.0
  %1192 = vmatpush1.msra.mxu0 %v326
  %1193 = vmatprep.subr.mxu0 0.0
  %1194 = vmatpush1.msra.mxu0 %v327
  %1195 = vmatprep.subr.mxu0 0.0
  %1196 = vmatpush1.msra.mxu0 %v328
  %1197 = vmatprep.subr.mxu0 0.0
  %1198 = vmatpush1.msra.mxu0 %v329
  %1199 = vmatprep.subr.mxu0 0.0
  %1200 = vmatpush1.msra.mxu0 %v330
  %1201 = vmatprep.subr.mxu0 0.0
  %1202 = vmatpush1.msra.mxu0 %v331
  %1203 = vmatprep.subr.mxu0 0.0
  %1204 = vmatpush1.msra.mxu0 %v332
  %1205 = vmatprep.subr.mxu0 0.0
  %1206 = vmatpush1.msra.mxu0 %v333
  %1207 = vmatprep.subr.mxu0 0.0
  %1208 = vmatpush1.msra.mxu0 %v334
  %1209 = vmatprep.subr.mxu0 0.0
  %1210 = vmatpush1.msra.mxu0 %v335
  %1211 = vmatprep.subr.mxu0 0.0
  %1212 = vmatpush1.msra.mxu0 %v336
  %1213 = vmatprep.subr.mxu0 0.0
  %1214 = vmatpush1.msra.mxu0 %v337
  %1215 = vmatprep.subr.mxu0 0.0
  %1216 = vmatpush1.msra.mxu0 %v338
  %1217 = vmatprep.subr.mxu0 0.0
  %1218 = vmatpush1.msra.mxu0 %v339
  %1219 = vmatprep.mubr.f32.mxu0 %v485
  %1220 = vmatmul.mubr.f32.gmra.mrb[0].mxu0 %v483
  %v1221 = vpop.f32.mrb[0].mxu0
  %v1222 = vadd.f32 %v1152, %v1221
  %v1223 = vpop.f32.mrb[0].mxu0
  %1224 = vdwg.mxu0
  %1225 = vmatprep.subr.mxu0 0.0
  %1226 = vmatpush1.msra.mxu0 %v340
  %1227 = vmatprep.subr.mxu0 0.0
  %1228 = vmatpush1.msra.mxu0 %v341
  %1229 = vmatprep.subr.mxu0 0.0
  %1230 = vmatpush1.msra.mxu0 %v342
  %1231 = vmatprep.subr.mxu0 0.0
  %1232 = vmatpush1.msra.mxu0 %v343
  %1233 = vmatprep.subr.mxu0 0.0
  %1234 = vmatpush1.msra.mxu0 %v344
  %1235 = vmatprep.subr.mxu0 0.0
  %1236 = vmatpush1.msra.mxu0 %v345
  %1237 = vmatprep.subr.mxu0 0.0
  %1238 = vmatpush1.msra.mxu0 %v346
  %1239 = vmatprep.subr.mxu0 0.0
  %1240 = vmatpush1.msra.mxu0 %v347
  %1241 = vmatprep.subr.mxu0 0.0
  %1242 = vmatpush1.msra.mxu0 %v348
  %1243 = vmatprep.subr.mxu0 0.0
  %1244 = vmatpush1.msra.mxu0 %v349
  %1245 = vmatprep.subr.mxu0 0.0
  %1246 = vmatpush1.msra.mxu0 %v350
  %1247 = vmatprep.subr.mxu0 0.0
  %1248 = vmatpush1.msra.mxu0 %v351
  %1249 = vmatprep.subr.mxu0 0.0
  %1250 = vmatpush1.msra.mxu0 %v352
  %1251 = vmatprep.subr.mxu0 0.0
  %1252 = vmatpush1.msra.mxu0 %v353
  %1253 = vmatprep.subr.mxu0 0.0
  %1254 = vmatpush1.msra.mxu0 %v354
  %1255 = vmatprep.subr.mxu0 0.0
  %1256 = vmatpush1.msra.mxu0 %v355
  %1257 = vmatprep.subr.mxu0 0.0
  %1258 = vmatpush1.msra.mxu0 %v356
  %1259 = vmatprep.subr.mxu0 0.0
  %1260 = vmatpush1.msra.mxu0 %v357
  %1261 = vmatprep.subr.mxu0 0.0
  %1262 = vmatpush1.msra.mxu0 %v358
  %1263 = vmatprep.subr.mxu0 0.0
  %1264 = vmatpush1.msra.mxu0 %v359
  %1265 = vmatprep.subr.mxu0 0.0
  %1266 = vmatpush1.msra.mxu0 %v360
  %1267 = vmatprep.subr.mxu0 0.0
  %1268 = vmatpush1.msra.mxu0 %v361
  %1269 = vmatprep.subr.mxu0 0.0
  %1270 = vmatpush1.msra.mxu0 %v362
  %1271 = vmatprep.subr.mxu0 0.0
  %1272 = vmatpush1.msra.mxu0 %v363
  %1273 = vmatprep.subr.mxu0 0.0
  %1274 = vmatpush1.msra.mxu0 %v364
  %1275 = vmatprep.subr.mxu0 0.0
  %1276 = vmatpush1.msra.mxu0 %v365
  %1277 = vmatprep.subr.mxu0 0.0
  %1278 = vmatpush1.msra.mxu0 %v366
  %1279 = vmatprep.subr.mxu0 0.0
  %1280 = vmatpush1.msra.mxu0 %v367
  %1281 = vmatprep.subr.mxu0 0.0
  %1282 = vmatpush1.msra.mxu0 %v368
  %1283 = vmatprep.subr.mxu0 0.0
  %1284 = vmatpush1.msra.mxu0 %v369
  %1285 = vmatprep.subr.mxu0 0.0
  %1286 = vmatpush1.msra.mxu0 %v370
  %1287 = vmatprep.subr.mxu0 0.0
  %1288 = vmatpush1.msra.mxu0 %v371
  %1289 = vmatprep.mubr.f32.mxu0 %v501
  %1290 = vmatmul.mubr.f32.gmra.mrb[0].mxu0 %v493
  %v1291 = vpop.f32.mrb[0].mxu0
  %v1292 = vadd.f32 %v1222, %v1291
  %v1293 = vpop.f32.mrb[0].mxu0
  %1294 = vdwg.mxu0
  %1295 = vmatprep.subr.mxu0 0.0
  %1296 = vmatpush1.msra.mxu0 %v372
  %1297 = vmatprep.subr.mxu0 0.0
  %1298 = vmatpush1.msra.mxu0 %v373
  %1299 = vmatprep.subr.mxu0 0.0
  %1300 = vmatpush1.msra.mxu0 %v374
  %1301 = vmatprep.subr.mxu0 0.0
  %1302 = vmatpush1.msra.mxu0 %v375
  %1303 = vmatprep.subr.mxu0 0.0
  %1304 = vmatpush1.msra.mxu0 %v376
  %1305 = vmatprep.subr.mxu0 0.0
  %1306 = vmatpush1.msra.mxu0 %v377
  %1307 = vmatprep.subr.mxu0 0.0
  %1308 = vmatpush1.msra.mxu0 %v378
  %1309 = vmatprep.subr.mxu0 0.0
  %1310 = vmatpush1.msra.mxu0 %v379
  %1311 = vmatprep.subr.mxu0 0.0
  %1312 = vmatpush1.msra.mxu0 %v380
  %1313 = vmatprep.subr.mxu0 0.0
  %1314 = vmatpush1.msra.mxu0 %v381
  %1315 = vmatprep.subr.mxu0 0.0
  %1316 = vmatpush1.msra.mxu0 %v382
  %1317 = vmatprep.subr.mxu0 0.0
  %1318 = vmatpush1.msra.mxu0 %v383
  %1319 = vmatprep.subr.mxu0 0.0
  %1320 = vmatpush1.msra.mxu0 %v384
  %1321 = vmatprep.subr.mxu0 0.0
  %1322 = vmatpush1.msra.mxu0 %v385
  %1323 = vmatprep.subr.mxu0 0.0
  %1324 = vmatpush1.msra.mxu0 %v386
  %1325 = vmatprep.subr.mxu0 0.0
  %1326 = vmatpush1.msra.mxu0 %v387
  %1327 = vmatprep.subr.mxu0 0.0
  %1328 = vmatpush1.msra.mxu0 0.0
  %1329 = vmatprep.subr.mxu0 0.0
  %1330 = vmatpush1.msra.mxu0 0.0
  %1331 = vmatprep.subr.mxu0 0.0
  %1332 = vmatpush1.msra.mxu0 0.0
  %1333 = vmatprep.subr.mxu0 0.0
  %1334 = vmatpush1.msra.mxu0 0.0
  %1335 = vmatprep.subr.mxu0 0.0
  %1336 = vmatpush1.msra.mxu0 0.0
  %1337 = vmatprep.subr.mxu0 0.0
  %1338 = vmatpush1.msra.mxu0 0.0
  %1339 = vmatprep.subr.mxu0 0.0
  %1340 = vmatpush1.msra.mxu0 0.0
  %1341 = vmatprep.subr.mxu0 0.0
  %1342 = vmatpush1.msra.mxu0 0.0
  %1343 = vmatprep.subr.mxu0 0.0
  %1344 = vmatpush1.msra.mxu0 0.0
  %1345 = vmatprep.subr.mxu0 0.0
  %1346 = vmatpush1.msra.mxu0 0.0
  %1347 = vmatprep.subr.mxu0 0.0
  %1348 = vmatpush1.msra.mxu0 0.0
  %1349 = vmatprep.subr.mxu0 0.0
  %1350 = vmatpush1.msra.mxu0 0.0
  %1351 = vmatprep.subr.mxu0 0.0
  %1352 = vmatpush1.msra.mxu0 0.0
  %1353 = vmatprep.subr.mxu0 0.0
  %1354 = vmatpush1.msra.mxu0 0.0
  %1355 = vmatprep.subr.mxu0 0.0
  %1356 = vmatpush1.msra.mxu0 0.0
  %1357 = vmatprep.subr.mxu0 0.0
  %1358 = vmatpush1.msra.mxu0 0.0
  %1359 = vmatprep.mubr.f32.mxu0 0.0
  %1360 = vmatmul.mubr.f32.gmra.mrb[0].mxu0 %v500
  %v1361 = vpop.f32.mrb[0].mxu0
  %v1362 = vadd.f32 %v1292, %v1361
  %v1363 = vpop.f32.mrb[0].mxu0
  %1364 = vdwg.mxu0
  %v1365 = vxor.u32 %v1362, 2147483648
  %v1366 = vmul.f32 %v1365, 1.442695
  %v1367 = vpow.pop %v1366
  %v1368 = vadd.f32 %v1367, 1.0
  %v1369 = vrcp.pop %v1368
  %v1370 = vmul.f32 1.0, %v1369
  %1371 = vst [vmem:[%s3] sm:$0x3] %v1370
  // Predicated region
  $region14: #{channel_att_bridge.1} parent=0 // pred_check
    _
  $region15: #{channel_att_bridge.1} parent=0 // pred_check_branch
    %1373 = sbr.rel (0) target = $region17
  $region16: #{channel_att_bridge.1} parent=0 // pred_region
    _
  $region17: #{channel_att_bridge.1} parent=0 // pred_fallthru
    _
  // Predicated region
  $region18: #{channel_att_bridge.1} parent=0 // pred_check
    _
  $region19: #{channel_att_bridge.1} parent=0 // pred_check_branch
    %1375 = sbr.rel (0) target = $region21
  $region20: #{channel_att_bridge.1} parent=0 // pred_region
    _
  $region21: #{channel_att_bridge.1} parent=0 // pred_fallthru
    _

</llo_original>
